<compile_context>
chip_gen: v6e
topology: v6e:2x2x1
jax: 0.10.0
libtpu: 0.0.40
codegen_flags: <defaults>
</compile_context>

<pallas_src>
import jax
import jax.numpy as jnp
from jax.experimental import pallas as pl
from jax.experimental.pallas import tpu as pltpu


# ------------------------------ kernels ------------------------------------

def _stats_kernel(x_ref, sum_ref, sq_ref):
    """Fused streaming reduction: per-lane partial sum(x) and sum(x*x).

    Grid is (P, T): outer 'parallel' axis P splits the row range (v7x megacore),
    inner 'arbitrary' axis T walks the row tiles of that split.  The (1,1,lanes)
    output block for a given p stays resident in VMEM across the inner axis, so
    we accumulate directly into it.
    """
    @pl.when(pl.program_id(1) == 0)
    def _():
        sum_ref[...] = jnp.zeros_like(sum_ref)
        sq_ref[...] = jnp.zeros_like(sq_ref)

    x = x_ref[...].astype(jnp.float32)
    sum_ref[...] += jnp.sum(x, axis=0, keepdims=True)[None]
    sq_ref[...] += jnp.sum(x * x, axis=0, keepdims=True)[None]


def _apply_kernel(x_ref, bias_ref, mult_ref, out_ref):
    """Elementwise: out = (x - bias) * mult, all lane-dense."""
    x = x_ref[...].astype(jnp.float32)
    out_ref[...] = ((x - bias_ref[...]) * mult_ref[...]).astype(out_ref.dtype)


# ------------------------------ wrapper -------------------------------------

def actnorm_forward(x_nhwc, scale=1.0, tm_max=2048):
    """ActNorm forward (training path: data-dependent init on the first call).

    Returns (out [N,H,W,C], logs [1,1,1,C]) matching the PyTorch module.
    """
    N, H, W, C = x_nhwc.shape
    M = N * H * W
    total = M * C

    # Lane-dense layout when C divides 128; otherwise fall back to [M, C].
    if C <= 128 and 128 % C == 0:
        lanes, repeats = 128, 128 // C
    else:
        lanes, repeats = C, 1

    rows = -(-total // lanes)                 # ceil
    tm = min(tm_max, rows)                    # tm_max is a multiple of 8
    tiles = -(-rows // tm)
    P = 2 if tiles >= 2 else 1                # 2-way split of the reduction (v7x megacore)
    tiles_per_part = -(-tiles // P)
    padded_rows = P * tiles_per_part * tm

    x_flat = x_nhwc.reshape(-1)
    pad = padded_rows * lanes - total
    if pad:
        x_flat = jnp.pad(x_flat, (0, pad))    # zeros: no effect on the sums
    xd = x_flat.reshape(padded_rows, lanes)

    row_spec = pl.BlockSpec((tm, lanes), lambda i: (i, 0))
    stat_spec = pl.BlockSpec((1, lanes), lambda i: (0, 0))

    # ---- pass 1: fused sum / sum-of-squares reduction (x streamed once) ------
    sum_parts, sq_parts = pl.pallas_call(
        _stats_kernel,
        out_shape=(jax.ShapeDtypeStruct((P, 1, lanes), jnp.float32),
                   jax.ShapeDtypeStruct((P, 1, lanes), jnp.float32)),
        grid=(P, tiles_per_part),
        in_specs=[pl.BlockSpec((tm, lanes),
                               lambda p, i: (p * tiles_per_part + i, 0))],
        out_specs=(pl.BlockSpec((1, 1, lanes), lambda p, i: (p, 0, 0)),
                   pl.BlockSpec((1, 1, lanes), lambda p, i: (p, 0, 0))),
        compiler_params=pltpu.CompilerParams(
            dimension_semantics=("parallel", "arbitrary")),
    )(xd)

    # ---- tiny O(C) epilogue: combine parts, fold lanes -> channels, stats -----
    # lane j of the dense view is channel j % C, so reshape(repeats, C).sum(0)
    # folds the per-lane partials into per-channel totals.
    s = jnp.sum(sum_parts, axis=(0, 1)).reshape(repeats, C).sum(axis=0)
    q = jnp.sum(sq_parts, axis=(0, 1)).reshape(repeats, C).sum(axis=0)
    bias_c = s / M
    # E[x^2] - E[x]^2 in f32; clamp against tiny negative from rounding.
    var_c = jnp.maximum(q / M - bias_c * bias_c, 0.0)
    logs_c = jnp.log(scale / (jnp.sqrt(var_c) + 1e-6))
    mult_c = jnp.exp(logs_c)

    # Broadcast back to the lane-dense (1, lanes) pattern for the apply pass.
    bias_d = jnp.tile(bias_c, repeats).reshape(1, lanes)
    mult_d = jnp.tile(mult_c, repeats).reshape(1, lanes)

    # ---- pass 2: elementwise (x - bias) * exp(logs), lane-dense tiles ---------
    out_d = pl.pallas_call(
        _apply_kernel,
        out_shape=jax.ShapeDtypeStruct((padded_rows, lanes), x_nhwc.dtype),
        grid=(padded_rows // tm,),
        in_specs=[row_spec, stat_spec, stat_spec],
        out_specs=row_spec,
        compiler_params=pltpu.CompilerParams(dimension_semantics=("parallel",)),
    )(xd, bias_d, mult_d)

    out = out_d.reshape(-1)[:total].reshape(N, H, W, C)
    logs = logs_c.reshape(1, 1, 1, C)
    return out, logs


# ------------------------------ reference -----------------------------------

def actnorm_reference(x_nhwc, scale=1.0):
    bias = jnp.mean(x_nhwc, axis=(0, 1, 2), keepdims=True)
    var = jnp.mean((x_nhwc - bias) ** 2, axis=(0, 1, 2), keepdims=True)
    logs = jnp.log(scale / (jnp.sqrt(var) + 1e-6))
    return (x_nhwc - bias) * jnp.exp(logs), logs


# ------------------------------ main -----------------------------------------

if __name__ == "__main__":
    key = jax.random.PRNGKey(0)
    shapes = [
        (2, 16, 16, 4),    # small NHWC, lane-dense path (C=4), single tile
        (3, 20, 20, 4),    # exercises zero-padding of the lane-dense view
        (8, 64, 64, 16),   # lane-dense, multi-tile, 2-way parallel reduction
        (4, 64, 64, 12),   # C does not divide 128 -> [M, C] fallback path
    ]
    for (N, H, W, C) in shapes:
        key, sub = jax.random.split(key)
        x = jax.random.normal(sub, (N, H, W, C), dtype=jnp.float32) * 1.5 + 0.3
        out, logs = actnorm_forward(x, scale=1.0)
        out, logs = jax.block_until_ready((out, logs))

        ref_out, ref_logs = actnorm_reference(x, scale=1.0)
        assert out.shape == (N, H, W, C) and logs.shape == (1, 1, 1, C)
        assert jnp.allclose(out, ref_out, atol=1e-4, rtol=1e-4), \
            f"out mismatch for shape {(N, H, W, C)}"
        assert jnp.allclose(logs, ref_logs, atol=1e-4, rtol=1e-4), \
            f"logs mismatch for shape {(N, H, W, C)}"

    print("KERNEL_OK")
</pallas_src>

<mosaic_0001>
module attributes {stable_mosaic.version = 11 : i64} {
  func.func @_stats_kernel(%arg0: i32, %arg1: i32, %arg2: memref<16x128xf32, #tpu.memory_space<vmem>>, %arg3: memref<1x1x128xf32, #tpu.memory_space<vmem>>, %arg4: memref<1x1x128xf32, #tpu.memory_space<vmem>>) attributes {dimension_semantics = [#tpu.dimension_semantics<parallel>, #tpu.dimension_semantics<arbitrary>], iteration_bounds = array<i64: 1, 1>, scalar_prefetch = 0 : i64, scratch_operands = 0 : i64, tpu.core_type = #tpu.core_type<tc>, window_params = [{transform_indices = @transform_0, window_bounds = array<i64: 16, 128>}, {transform_indices = @transform_1, window_bounds = array<i64: 1, 1, 128>}, {transform_indices = @transform_2, window_bounds = array<i64: 1, 1, 128>}]} {
    %c0_i32 = arith.constant 0 : i32
    %0 = arith.cmpi eq, %arg1, %c0_i32 : i32
    %1 = arith.extui %0 : i1 to i32
    %c0_i32_0 = arith.constant 0 : i32
    %2 = arith.cmpi ne, %1, %c0_i32_0 : i32
    scf.if %2 {
      %cst_15 = arith.constant 0.000000e+00 : f32
      %17 = vector.broadcast %cst_15 : f32 to vector<1x1x128xf32>
      %c0_16 = arith.constant 0 : index
      %c0_17 = arith.constant 0 : index
      %c0_18 = arith.constant 0 : index
      %18 = vector.load %arg3[%c0_16, %c0_17, %c0_18] : memref<1x1x128xf32, #tpu.memory_space<vmem>>, vector<1x1x128xf32>
      tpu.vector_store %arg3[%c0_16, %c0_17, %c0_18], %17 {strides = array<i32>} : memref<1x1x128xf32, #tpu.memory_space<vmem>>, vector<1x1x128xf32>,
      %cst_19 = arith.constant 0.000000e+00 : f32
      %19 = vector.broadcast %cst_19 : f32 to vector<1x1x128xf32>
      %c0_20 = arith.constant 0 : index
      %c0_21 = arith.constant 0 : index
      %c0_22 = arith.constant 0 : index
      %20 = vector.load %arg4[%c0_20, %c0_21, %c0_22] : memref<1x1x128xf32, #tpu.memory_space<vmem>>, vector<1x1x128xf32>
      tpu.vector_store %arg4[%c0_20, %c0_21, %c0_22], %19 {strides = array<i32>} : memref<1x1x128xf32, #tpu.memory_space<vmem>>, vector<1x1x128xf32>,
    } else {
    }
    %c0 = arith.constant 0 : index
    %c0_1 = arith.constant 0 : index
    %3 = vector.load %arg2[%c0, %c0_1] : memref<16x128xf32, #tpu.memory_space<vmem>>, vector<16x128xf32>
    %c0_2 = arith.constant 0 : index
    %c0_3 = arith.constant 0 : index
    %c0_4 = arith.constant 0 : index
    %4 = vector.load %arg3[%c0_2, %c0_3, %c0_4] : memref<1x1x128xf32, #tpu.memory_space<vmem>>, vector<1x1x128xf32>
    %cst = arith.constant dense<0.000000e+00> : vector<128xf32>
    %5 = vector.multi_reduction <add>, %3, %cst [0] : vector<16x128xf32> to vector<128xf32>
    %6 = vector.shape_cast %5 : vector<128xf32> to vector<1x128xf32>
    %7 = vector.shape_cast %6 : vector<1x128xf32> to vector<1x1x128xf32>
    %8 = arith.addf %4, %7 : vector<1x1x128xf32>
    %c0_5 = arith.constant 0 : index
    %c0_6 = arith.constant 0 : index
    %c0_7 = arith.constant 0 : index
    %9 = vector.load %arg3[%c0_5, %c0_6, %c0_7] : memref<1x1x128xf32, #tpu.memory_space<vmem>>, vector<1x1x128xf32>
    tpu.vector_store %arg3[%c0_5, %c0_6, %c0_7], %8 {strides = array<i32>} : memref<1x1x128xf32, #tpu.memory_space<vmem>>, vector<1x1x128xf32>,
    %c0_8 = arith.constant 0 : index
    %c0_9 = arith.constant 0 : index
    %c0_10 = arith.constant 0 : index
    %10 = vector.load %arg4[%c0_8, %c0_9, %c0_10] : memref<1x1x128xf32, #tpu.memory_space<vmem>>, vector<1x1x128xf32>
    %11 = arith.mulf %3, %3 : vector<16x128xf32>
    %cst_11 = arith.constant dense<0.000000e+00> : vector<128xf32>
    %12 = vector.multi_reduction <add>, %11, %cst_11 [0] : vector<16x128xf32> to vector<128xf32>
    %13 = vector.shape_cast %12 : vector<128xf32> to vector<1x128xf32>
    %14 = vector.shape_cast %13 : vector<1x128xf32> to vector<1x1x128xf32>
    %15 = arith.addf %10, %14 : vector<1x1x128xf32>
    %c0_12 = arith.constant 0 : index
    %c0_13 = arith.constant 0 : index
    %c0_14 = arith.constant 0 : index
    %16 = vector.load %arg4[%c0_12, %c0_13, %c0_14] : memref<1x1x128xf32, #tpu.memory_space<vmem>>, vector<1x1x128xf32>
    tpu.vector_store %arg4[%c0_12, %c0_13, %c0_14], %15 {strides = array<i32>} : memref<1x1x128xf32, #tpu.memory_space<vmem>>, vector<1x1x128xf32>,
    return
  }
  func.func @transform_0(%arg0: i32, %arg1: i32) -> (i32, i32) {
    %c1_i32 = arith.constant 1 : i32
    %0 = arith.muli %arg0, %c1_i32 : i32
    %1 = arith.addi %0, %arg1 : i32
    %c0_i32 = arith.constant 0 : i32
    %c0_i32_0 = arith.constant 0 : i32
    return %1, %c0_i32 : i32, i32
  }
  func.func @transform_1(%arg0: i32, %arg1: i32) -> (i32, i32, i32) {
    %c0_i32 = arith.constant 0 : i32
    %c0_i32_0 = arith.constant 0 : i32
    %c0_i32_1 = arith.constant 0 : i32
    return %arg0, %c0_i32, %c0_i32_0 : i32, i32, i32
  }
  func.func @transform_2(%arg0: i32, %arg1: i32) -> (i32, i32, i32) {
    %c0_i32 = arith.constant 0 : i32
    %c0_i32_0 = arith.constant 0 : i32
    %c0_i32_1 = arith.constant 0 : i32
    return %arg0, %c0_i32, %c0_i32_0 : i32, i32, i32
  }
}

</mosaic_0001>

<llo_original>
// kernel: tpu_custom_call.1
$region0: #{tpu_custom_call.1}
  #allocation0 [shape = 'u32[]', space=smem, size = 0x4, offset = 0x4, fixed_abs, tag = 'smem constant byte address 0x4 - core index']
  #allocation1 [shape = 'u32[144,128]{1,0:T(1,128)}', space=vmem, size = 0x12000, scoped, tag = 'internal scratch']
  %s0 = inlined_call_operand.hbm [shape: f32[16,128], index: 0, kind: input, shape index: {}]
  %s1 = inlined_call_operand.hbm [shape: f32[1,1,128], index: 1, kind: output, shape index: {0}]
  %s2 = inlined_call_operand.hbm [shape: f32[1,1,128], index: 2, kind: output, shape index: {1}]
  %3 = xla_tuple %s1, %s2
  %s4 = sld [smem:[#allocation0]]
  $region30: #{tpu_custom_call.1} parent=0
    _
  %s6 = ssub.s32 1, %s4
  %s7 = scalar_select 0, %s6, %s4
  $region1: #{tpu_custom_call.1} parent=0
    #allocation2 [shape = 'u8[8192]{0}', space=vmem, size = 0x2000, scoped, tag = 'input window, operand 0, single buffered']
    #allocation3 [shape = 's32[1]{0}', space=sflag, size = 0x4, scoped, tag = 'scoped memory for tpu_custom_call.1']
    #allocation4 [shape = 's32[1]{0}', space=sflag, size = 0x4, scoped, tag = 'scoped memory for tpu_custom_call.1']
    #allocation5 [shape = 'u8[512]{0}', space=vmem, size = 0x400, scoped, tag = 'output window, operand 0, single buffered']
    #allocation6 [shape = 'u8[512]{0}', space=vmem, size = 0x400, scoped, tag = 'output window, operand 1, single buffered']
    #allocation7 [shape = 's32[1]{0}', space=sflag, size = 0x4, scoped, tag = 'scoped memory for tpu_custom_call.1']
    %8 = vsyncpa [#allocation3], 0
    %9 = vsyncpa [#allocation4], 0
    %10 = vsyncpa [#allocation7], 0
    // Predicated region
    $region2: #{tpu_custom_call.1} parent=1 // pred_check
      _
    $region3: #{tpu_custom_call.1} parent=1 // pred_check_branch
      %12 = sbr.rel (0) target = $region5
    $region4: #{tpu_custom_call.1} parent=1 // pred_region
      %s13 = sadd.s32 0, 0
      %s14 = smul.u32 2, %s13
      %s16 = ssub.s32 256, 256
      %17 = vsyncadd [#allocation3], %s16
      %s18 = smul.addr %s14, 128
      %s19 = scalar_lea.hbm %s0, %s18
      %s20 = sshll.u32 [#allocation2], 4
      %s21 = int_to_ptr.vmem [resolvable:$true] %s20
      %26 = dma.hbm_to_vmem [thread:$0]  %s19, 256, %s21, [#allocation3], 128, 128, 8
    $region5: #{tpu_custom_call.1} parent=1 // pred_fallthru
      _
    // Predicated region
    $region6: #{tpu_custom_call.1} parent=1 // pred_check
      _
    $region7: #{tpu_custom_call.1} parent=1 // pred_check_branch
      %28 = sbr.rel (0) target = $region9
    $region8: #{tpu_custom_call.1} parent=1 // pred_region
      %29 = dma.done [#allocation3], 256
    $region9: #{tpu_custom_call.1} parent=1 // pred_fallthru
      _
    %s30 = sadd.s32 0, 0
    %s31 = smul.u32 2, %s30
    %p32 = scmp.eq.s32.totalorder 0, 0
    // Predicated region
    $region10: #{tpu_custom_call.1} parent=1 // pred_check
      %p33 = pneg %p32
    $region11: #{tpu_custom_call.1} parent=1 // pred_check_branch
      %35 = sbr.rel (%p33) target = $region13
    $region12: #{tpu_custom_call.1} parent=1 // pred_region
      %36 = vst [vmem:[#allocation5] sm:$0x1] 0.0
      %37 = vst [vmem:[#allocation6] sm:$0x1] 0.0
    $region13: #{tpu_custom_call.1} parent=1 // pred_fallthru
      _
    %v38 = vld [vmem:[#allocation2] sm:$0xff]
    %v39 = vld [vmem:[#allocation2 + $0x8] sm:$0xff]
    %v40 = vld [vmem:[#allocation5] sm:$0x1]
    %v41 = vadd.f32 %v38, %v39
    %v42 = vrot.slane %v41, 4
    %v43 = vadd.f32 %v41, %v42
    %v44 = vrot.slane %v43, 2
    %v45 = vadd.f32 %v43, %v44
    %v46 = vrot.slane %v45, 1
    %v47 = vadd.f32 %v45, %v46
    %v48 = vadd.f32 %v40, %v47
    %49 = vst [vmem:[#allocation5] sm:$0x1] %v48
    %v50 = vld [vmem:[#allocation6] sm:$0x1]
    %v51 = vmul.f32 %v38, %v38
    %v52 = vmul.f32 %v39, %v39
    %v53 = vadd.f32 %v51, %v52
    %v54 = vrot.slane %v53, 4
    %v55 = vadd.f32 %v53, %v54
    %v56 = vrot.slane %v55, 2
    %v57 = vadd.f32 %v55, %v56
    %v58 = vrot.slane %v57, 1
    %v59 = vadd.f32 %v57, %v58
    %v60 = vadd.f32 %v50, %v59
    %61 = vst [vmem:[#allocation6] sm:$0x1] %v60
    // Predicated region
    $region14: #{tpu_custom_call.1} parent=1 // pred_check
      _
    $region15: #{tpu_custom_call.1} parent=1 // pred_check_branch
      %63 = sbr.rel (0) target = $region17
    $region16: #{tpu_custom_call.1} parent=1 // pred_region
      %s65 = ssub.s32 16, 16
      %66 = vsyncadd [#allocation4], %s65
      %s68 = sshll.u32 [#allocation5], 4
      %s69 = int_to_ptr.vmem [resolvable:$true] %s68
      %71 = dma.vmem_to_hbm [thread:$0]  %s69, 16, %s1, [#allocation4]
    $region17: #{tpu_custom_call.1} parent=1 // pred_fallthru
      _
    // Predicated region
    $region18: #{tpu_custom_call.1} parent=1 // pred_check
      _
    $region19: #{tpu_custom_call.1} parent=1 // pred_check_branch
      %73 = sbr.rel (0) target = $region21
    $region20: #{tpu_custom_call.1} parent=1 // pred_region
      %s75 = ssub.s32 16, 16
      %76 = vsyncadd [#allocation7], %s75
      %s78 = sshll.u32 [#allocation6], 4
      %s79 = int_to_ptr.vmem [resolvable:$true] %s78
      %81 = dma.vmem_to_hbm [thread:$0]  %s79, 16, %s2, [#allocation7]
    $region21: #{tpu_custom_call.1} parent=1 // pred_fallthru
      _
    // Predicated region
    $region22: #{tpu_custom_call.1} parent=1 // pred_check
      _
    $region23: #{tpu_custom_call.1} parent=1 // pred_check_branch
      %83 = sbr.rel (0) target = $region25
    $region24: #{tpu_custom_call.1} parent=1 // pred_region
      %84 = dma.done [#allocation4], 16
    $region25: #{tpu_custom_call.1} parent=1 // pred_fallthru
      _
    // Predicated region
    $region26: #{tpu_custom_call.1} parent=1 // pred_check
      _
    $region27: #{tpu_custom_call.1} parent=1 // pred_check_branch
      %86 = sbr.rel (0) target = $region29
    $region28: #{tpu_custom_call.1} parent=1 // pred_region
      %87 = dma.done [#allocation7], 16
    $region29: #{tpu_custom_call.1} parent=1 // pred_fallthru
      _
    %88 = vsyncpa [#allocation3], 1
    %89 = vsyncpa [#allocation4], 1
    %90 = vsyncpa [#allocation7], 1

</llo_original>
